<compile_context>
chip_gen: v6e
topology: v6e:2x2x1
jax: 0.10.0
libtpu: 0.0.40
codegen_flags: <defaults>
</compile_context>

<pallas_src>
import functools

import jax
import jax.numpy as jnp
import numpy as np
from jax import lax
from jax.experimental import pallas as pl
from jax.experimental.pallas import tpu as pltpu


def _rev_static(a, axis):
    """Reverse `a` along `axis` with static 1-wide slices.

    Only applied to halo slabs of extent p (the pad width, small), so this is
    O(p) tiny slices, never O(H*W)."""
    n = a.shape[axis]
    if n <= 1:
        return a
    pieces = []
    for i in range(n - 1, -1, -1):
        idx = [slice(None)] * a.ndim
        idx[axis] = slice(i, i + 1)
        pieces.append(a[tuple(idx)])
    return jnp.concatenate(pieces, axis=axis)


def _neumann_pad_kernel(x_ref, o_ref, *, p, H, W, use_mxu):
    Wp = W + 2 * p
    x = x_ref[...]                      # (cblk, H, W)
    cblk = x.shape[0]

    if use_mxu:
        # One-hot gather along W on the idle MXU: rows = x2d @ G, G (W, Wp).
        # Exact for bf16 inputs (0/1 coefficients, f32 accumulation).
        out_col = lax.broadcasted_iota(jnp.int32, (W, Wp), 1)
        src_col = jnp.where(
            out_col < p, (p - 1) - out_col,
            jnp.where(out_col < p + W, out_col - p, (2 * W + p - 1) - out_col))
        in_col = lax.broadcasted_iota(jnp.int32, (W, Wp), 0)
        gather_w = jnp.where(src_col == in_col, 1.0, 0.0).astype(x.dtype)
        rows = jnp.dot(x.reshape(cblk * H, W), gather_w,
                       preferred_element_type=jnp.float32)
        rows = rows.reshape(cblk, H, Wp).astype(o_ref.dtype)
    else:
        # Assemble full-width rows once (single lane-alignment pass) instead
        # of interior + two masked strip stores.
        rows = jnp.concatenate(
            [_rev_static(x[:, :, 0:p], 2), x, _rev_static(x[:, :, W - p:W], 2)],
            axis=2)                     # (cblk, H, Wp)

    # Interior rows: one full-width, lane-0-aligned store.
    o_ref[:, p:p + H, :] = rows
    # Top / bottom bands reuse the W-padded rows (sublane mirror) -> corners
    # are already correct, no extra corner assembly.
    o_ref[:, 0:p, :] = _rev_static(rows[:, 0:p, :], 1)
    o_ref[:, p + H:p + H + p, :] = _rev_static(rows[:, H - p:H, :], 1)


def _generation_params():
    """(live block budget bytes, vmem_limit_bytes or None, min grid steps)."""
    try:
        kind = jax.devices()[0].device_kind.lower()
    except Exception:
        kind = ""
    if "v7" in kind or "7x" in kind:
        # 64 MiB VMEM/TC, 2 TensorCores: keep >=4 steps so each core can
        # still double-buffer after megacore sharding.
        return 28 << 20, 44 << 20, 4
    if "v6" in kind or "trillium" in kind:
        # 128 MiB VMEM, single TC: big blocks, >=3 steps for pipeline overlap.
        return 56 << 20, 96 << 20, 3
    if "v5 lite" in kind or "v5e" in kind or "v5lite" in kind:
        return 40 << 20, 80 << 20, 3
    # Unknown device: stay conservative and do not touch the VMEM limit.
    return 16 << 20, None, 3


def _choose_channel_block(nc, h, w, hp, wp, itemsize, live_budget, min_steps):
    """Largest fused-channel block whose double-buffered in+out data fits the
    per-generation VMEM budget, while keeping >= min_steps grid steps when the
    input is large enough.  No divisibility requirement (grid uses cdiv)."""
    per_c = (h * w + hp * wp) * itemsize * 2    # double-buffered input + output
    cblk = max(1, int(live_budget // per_c))
    cblk = min(cblk, nc)
    if nc >= min_steps:
        cblk = min(cblk, max(1, nc // min_steps))
    return cblk


def neumann_pad2d(f, size=1, *, channel_block=None):
    """Pallas implementation of NeumannPad2d.forward. f: (N, C, H, W)."""
    N, C, H, W = f.shape
    p = int(size)
    # Pads wider than the spatial dims are outside the mirrored contract.
    assert 1 <= p <= H and p <= W, "pad size must not exceed spatial dims"
    Hp, Wp = H + 2 * p, W + 2 * p

    NC = N * C
    dtype = jnp.dtype(f.dtype)
    itemsize = dtype.itemsize

    live_budget, vmem_limit, min_steps = _generation_params()
    if channel_block is None:
        cblk = _choose_channel_block(NC, H, W, Hp, Wp, itemsize,
                                     live_budget, min_steps)
    else:
        cblk = max(1, min(int(channel_block), NC))
    grid = (int(pl.cdiv(NC, cblk)),)

    # MXU one-hot gather: exact for bf16; f32 keeps the concat path so results
    # never depend on the f32 matmul multi-pass policy.  Gate on sublane
    # alignment (packed bf16 tiles) and on W small enough that the O(W*Wp)
    # MXU work stays under the HBM roofline.
    use_mxu = (dtype == jnp.dtype(jnp.bfloat16)) and (H % 16 == 0) and (W <= 256)

    cp_kwargs = dict(dimension_semantics=("parallel",))
    if vmem_limit is not None:
        cp_kwargs["vmem_limit_bytes"] = vmem_limit

    kernel = functools.partial(_neumann_pad_kernel, p=p, H=H, W=W,
                               use_mxu=use_mxu)
    out = pl.pallas_call(
        kernel,
        out_shape=jax.ShapeDtypeStruct((NC, Hp, Wp), f.dtype),
        grid=grid,
        in_specs=[pl.BlockSpec((cblk, H, W), lambda i: (i, 0, 0))],
        out_specs=pl.BlockSpec((cblk, Hp, Wp), lambda i: (i, 0, 0)),
        compiler_params=pltpu.CompilerParams(**cp_kwargs),
        cost_estimate=pl.CostEstimate(
            flops=(2 * NC * H * W * Wp) if use_mxu else 0,
            transcendentals=0,
            bytes_accessed=NC * (H * W + Hp * Wp) * itemsize),
    )(f.reshape(NC, H, W))
    return out.reshape(N, C, Hp, Wp)


def _reference(f, size):
    p = int(size)
    return jnp.pad(f, ((0, 0), (0, 0), (p, p), (p, p)), mode="symmetric")


def _check(out, ref):
    a = np.asarray(out.astype(jnp.float32))
    b = np.asarray(ref.astype(jnp.float32))
    return out.shape == ref.shape and np.allclose(a, b, rtol=1e-6, atol=1e-6)


if __name__ == "__main__":
    key = jax.random.PRNGKey(0)
    x = jax.random.normal(key, (2, 4, 16, 16), dtype=jnp.float32)

    ok = True

    # f32: concat path, auto block size.
    for size in (1, 2, 3):
        out = jax.block_until_ready(neumann_pad2d(x, size=size))
        if not _check(out, _reference(x, size)):
            ok = False
            print(f"MISMATCH f32 size={size}")

    # f32, N*C not a multiple of the block: exercises the ragged (cdiv) grid.
    x5 = jax.random.normal(key, (2, 5, 16, 16), dtype=jnp.float32)
    out = jax.block_until_ready(neumann_pad2d(x5, size=2, channel_block=3))
    if not _check(out, _reference(x5, 2)):
        ok = False
        print("MISMATCH f32 ragged-grid size=2")

    # bf16: exercises the MXU one-hot gather path (bit-exact).
    xb = x.astype(jnp.bfloat16)
    for size in (1, 2):
        out = jax.block_until_ready(neumann_pad2d(xb, size=size))
        if not _check(out, _reference(xb, size)):
            ok = False
            print(f"MISMATCH bf16 size={size}")

    if ok:
        print("KERNEL_OK")
</pallas_src>

<mosaic_0001>
module attributes {stable_mosaic.version = 11 : i64} {
  func.func @_neumann_pad_kernel(%arg0: i32, %arg1: memref<2x16x16xf32, #tpu.memory_space<vmem>>, %arg2: memref<2x18x18xf32, #tpu.memory_space<vmem>>) attributes {dimension_semantics = [#tpu.dimension_semantics<parallel>], iteration_bounds = array<i64: 4>, scalar_prefetch = 0 : i64, scratch_operands = 0 : i64, tpu.core_type = #tpu.core_type<tc>, window_params = [{transform_indices = @transform_0, window_bounds = array<i64: 2, 16, 16>}, {transform_indices = @transform_1, window_bounds = array<i64: 2, 18, 18>}]} {
    %c0 = arith.constant 0 : index
    %c0_0 = arith.constant 0 : index
    %c0_1 = arith.constant 0 : index
    %0 = vector.load %arg1[%c0, %c0_0, %c0_1] : memref<2x16x16xf32, #tpu.memory_space<vmem>>, vector<2x16x16xf32>
    %1 = vector.extract_strided_slice %0 {offsets = [0, 0, 0], sizes = [2, 16, 1], strides = [1, 1, 1]} : vector<2x16x16xf32> to vector<2x16x1xf32>
    %2 = vector.extract_strided_slice %0 {offsets = [0, 0, 15], sizes = [2, 16, 1], strides = [1, 1, 1]} : vector<2x16x16xf32> to vector<2x16x1xf32>
    %3 = tpu.concatenate %1, %0, %2 in 2 : vector<2x16x1xf32>, vector<2x16x16xf32>, vector<2x16x1xf32> -> vector<2x16x18xf32>
    %c0_2 = arith.constant 0 : index
    %c1 = arith.constant 1 : index
    %c0_3 = arith.constant 0 : index
    %4 = vector.load %arg2[%c0_2, %c1, %c0_3] : memref<2x18x18xf32, #tpu.memory_space<vmem>>, vector<2x16x18xf32>
    tpu.vector_store %arg2[%c0_2, %c1, %c0_3], %3 {strides = array<i32>} : memref<2x18x18xf32, #tpu.memory_space<vmem>>, vector<2x16x18xf32>,
    %5 = vector.extract_strided_slice %3 {offsets = [0, 0, 0], sizes = [2, 1, 18], strides = [1, 1, 1]} : vector<2x16x18xf32> to vector<2x1x18xf32>
    %c0_4 = arith.constant 0 : index
    %c0_5 = arith.constant 0 : index
    %c0_6 = arith.constant 0 : index
    %6 = vector.load %arg2[%c0_4, %c0_5, %c0_6] : memref<2x18x18xf32, #tpu.memory_space<vmem>>, vector<2x1x18xf32>
    tpu.vector_store %arg2[%c0_4, %c0_5, %c0_6], %5 {strides = array<i32>} : memref<2x18x18xf32, #tpu.memory_space<vmem>>, vector<2x1x18xf32>,
    %7 = vector.extract_strided_slice %3 {offsets = [0, 15, 0], sizes = [2, 1, 18], strides = [1, 1, 1]} : vector<2x16x18xf32> to vector<2x1x18xf32>
    %c0_7 = arith.constant 0 : index
    %c17 = arith.constant 17 : index
    %c0_8 = arith.constant 0 : index
    %8 = vector.load %arg2[%c0_7, %c17, %c0_8] : memref<2x18x18xf32, #tpu.memory_space<vmem>>, vector<2x1x18xf32>
    tpu.vector_store %arg2[%c0_7, %c17, %c0_8], %7 {strides = array<i32>} : memref<2x18x18xf32, #tpu.memory_space<vmem>>, vector<2x1x18xf32>,
    return
  }
  func.func @transform_0(%arg0: i32) -> (i32, i32, i32) {
    %c0_i32 = arith.constant 0 : i32
    %c0_i32_0 = arith.constant 0 : i32
    %c0_i32_1 = arith.constant 0 : i32
    return %arg0, %c0_i32, %c0_i32_0 : i32, i32, i32
  }
  func.func @transform_1(%arg0: i32) -> (i32, i32, i32) {
    %c0_i32 = arith.constant 0 : i32
    %c0_i32_0 = arith.constant 0 : i32
    %c0_i32_1 = arith.constant 0 : i32
    return %arg0, %c0_i32, %c0_i32_0 : i32, i32, i32
  }
}

</mosaic_0001>

<llo_original>
// kernel: tpu_custom_call.1
$region0: #{tpu_custom_call.1}
  #allocation0 [shape = 'u32[]', space=smem, size = 0x4, offset = 0x4, fixed_abs, tag = 'smem constant byte address 0x4 - core index']
  #allocation1 [shape = 'u32[144,128]{1,0:T(1,128)}', space=vmem, size = 0x12000, scoped, tag = 'internal scratch']
  %s0 = inlined_call_operand.hbm [shape: f32[8,16,16], index: 0, kind: input, shape index: {}]
  %s1 = inlined_call_operand.vmem [shape: f32[8,18,18], index: 1, kind: output, shape index: {}]
  %s2 = sld [smem:[#allocation0]]
  $region41: #{tpu_custom_call.1} parent=0
    _
  %s4 = ssub.s32 1, %s2
  %s5 = scalar_select 0, %s4, %s2
  $region1: #{tpu_custom_call.1} parent=0
    #allocation2 [shape = 'u8[32768]{0}', space=vmem, size = 0x8000, scoped, tag = 'input window, operand 0']
    #allocation3 [shape = 's32[2]{0}', space=sflag, size = 0x8, scoped, tag = 'scoped memory for tpu_custom_call.1']
    %6 = vsyncpa [#allocation3], 0
    %s7 = scalar_lea.sflag [#allocation3], 1
    %8 = vsyncpa %s7, 0
    loop: start=0, step=1, limit=6
    $region2: #{tpu_custom_call.1} parent=1 // loop_pre_header
      _
    $region3: #{tpu_custom_call.1} parent=1 // loop_header
      %s10 = sphi 0, %s14
      %p11 = scmp.ge.s32.totalorder %s10, 6
      %s20 = sphi 0, %s22
      %s23 = sphi 0, %s20
      %s24 = sphi 0, %s23
      %s40 = sphi 0, %s24
      %s46 = sphi 0, %s48
      %s49 = sphi 0, %s46
      %s50 = sphi 0, %s49
      %s66 = sphi 0, %s50
    $region4: #{tpu_custom_call.1} parent=1 // loop_header_branch
      %13 = sbr.rel (%p11) target = $region8
    $region5: #{tpu_custom_call.1} parent=1 // loop_body
      %s15 = ssub.s32 %s10, 1
      %s16 = ssub.s32 %s10, 2
      %s17 = sadd.s32 %s10, 1
      %s18 = ssub.s32 %s10, %s17
      %p19 = scmp.eq.s32.totalorder %s18, 0
      %s21 = sadd.s32 %s20, 1
      %s22 = scalar_select %p19, %s20, %s21
      %p25 = pneg %p19
      %p26 = scmp.eq.s32.totalorder %s10, 3
      %p27 = por %p25, %p26
      %p28 = scmp.ne.s32.totalorder %s20, %s23
      %p29 = scmp.eq.s32.totalorder %s10, 0
      %p30 = por %p28, %p29
      %p31 = scmp.ne.s32.totalorder %s20, %s23
      %p32 = scmp.eq.s32.totalorder %s15, 3
      %p33 = por %p31, %p32
      %p34 = scmp.ne.s32.totalorder %s23, %s24
      %p35 = scmp.eq.s32.totalorder %s15, 0
      %p36 = por %p34, %p35
      %p37 = scmp.ne.s32.totalorder %s23, %s24
      %p38 = scmp.eq.s32.totalorder %s16, 3
      %p39 = por %p37, %p38
      %p41 = scmp.ne.s32.totalorder %s24, %s40
      %p42 = scmp.eq.s32.totalorder %s16, 0
      %p43 = por %p41, %p42
      %s44 = ssub.s32 %s10, %s17
      %p45 = scmp.eq.s32.totalorder %s44, 0
      %s47 = sadd.s32 %s46, 1
      %s48 = scalar_select %p45, %s46, %s47
      %p51 = pneg %p45
      %p52 = scmp.eq.s32.totalorder %s10, 3
      %p53 = por %p51, %p52
      %p54 = scmp.ne.s32.totalorder %s46, %s49
      %p55 = scmp.eq.s32.totalorder %s10, 0
      %p56 = por %p54, %p55
      %p57 = scmp.ne.s32.totalorder %s46, %s49
      %p58 = scmp.eq.s32.totalorder %s15, 3
      %p59 = por %p57, %p58
      %p60 = scmp.ne.s32.totalorder %s49, %s50
      %p61 = scmp.eq.s32.totalorder %s15, 0
      %p62 = por %p60, %p61
      %p63 = scmp.ne.s32.totalorder %s49, %s50
      %p64 = scmp.eq.s32.totalorder %s16, 3
      %p65 = por %p63, %p64
      %p67 = scmp.ne.s32.totalorder %s50, %s66
      %p68 = scmp.eq.s32.totalorder %s16, 0
      %p69 = por %p67, %p68
      %p70 = scmp.le.s32.totalorder 1, %s10
      %p71 = scmp.lt.s32.totalorder %s10, 5
      %p72 = pnand %p70, %p71
      %p73 = pneg %p72
      // Predicated region
      $region9: #{tpu_custom_call.1} parent=5 // pred_check
        _
      $region10: #{tpu_custom_call.1} parent=5 // pred_check_branch
        %75 = sbr.rel (%p72) target = $region12
      $region11: #{tpu_custom_call.1} parent=5 // pred_region
        %s76 = ssub.s32 %s10, 1
      $region12: #{tpu_custom_call.1} parent=5 // pred_fallthru
        _
      %p77 = scmp.lt.s32.totalorder %s10, 4
      // Predicated region
      $region13: #{tpu_custom_call.1} parent=5 // pred_check
        %p78 = pneg %p77
      $region14: #{tpu_custom_call.1} parent=5 // pred_check_branch
        %80 = sbr.rel (%p78) target = $region16
      $region15: #{tpu_custom_call.1} parent=5 // pred_region
        // Predicated region
        $region17: #{tpu_custom_call.1} parent=15 // pred_check
          %p81 = pneg %p30
        $region18: #{tpu_custom_call.1} parent=15 // pred_check_branch
          %83 = sbr.rel (%p81) target = $region20
        $region19: #{tpu_custom_call.1} parent=15 // pred_region
          %s84 = sand.u32 %s20, 1
          %s85 = scalar_lea.sflag [#allocation3], %s84
          %s86 = sand.u32 %s20, 1
          %s87 = smul.addr %s86, 32
          %s88 = scalar_lea.vmem [#allocation2], %s87
          %s89 = smul.u32 2, %s10
          %s91 = ssub.s32 512, 512
          %92 = vsyncadd %s85, %s91
          %s93 = smul.addr %s89, 2
          %s94 = smul.addr %s93, 128
          %s95 = scalar_lea.hbm %s0, %s94
          %s96 = sshll.u32 %s88, 4
          %s97 = int_to_ptr.vmem [resolvable:$true] %s96
          %102 = dma.hbm_to_vmem [thread:$0]  %s95, 512, %s97, %s85, 128, 128, 8
        $region20: #{tpu_custom_call.1} parent=15 // pred_fallthru
          _
      $region16: #{tpu_custom_call.1} parent=5 // pred_fallthru
        _
      %p103 = scmp.le.s32.totalorder 1, %s10
      %p104 = scmp.lt.s32.totalorder %s10, 5
      %p105 = pnand %p103, %p104
      %p106 = pneg %p105
      // Predicated region
      $region21: #{tpu_custom_call.1} parent=5 // pred_check
        _
      $region22: #{tpu_custom_call.1} parent=5 // pred_check_branch
        %108 = sbr.rel (%p105) target = $region24
      $region23: #{tpu_custom_call.1} parent=5 // pred_region
        %s109 = ssub.s32 %s10, 1
        %s110 = sand.u32 %s23, 1
        %s111 = scalar_lea.sflag [#allocation3], %s110
        %s112 = sand.u32 %s23, 1
        %s113 = smul.addr %s112, 32
        %s114 = scalar_lea.vmem [#allocation2], %s113
        // Predicated region
        $region25: #{tpu_custom_call.1} parent=23 // pred_check
          %p115 = pneg %p36
        $region26: #{tpu_custom_call.1} parent=23 // pred_check_branch
          %117 = sbr.rel (%p115) target = $region28
        $region27: #{tpu_custom_call.1} parent=23 // pred_region
          %118 = dma.done %s111, 512
        $region28: #{tpu_custom_call.1} parent=23 // pred_fallthru
          _
        %s119 = sand.u32 %s23, 1
        %s120 = scalar_lea.sflag [#allocation3], %s119
        %s121 = sand.u32 %s23, 1
        %s122 = smul.addr %s121, 32
        %s123 = scalar_lea.vmem [#allocation2], %s122
        %p124 = pneg %p36
        %p125 = pneg %p33
        %p126 = pneg %p62
        %p127 = pneg %p59
        %s128 = smul.u32 2, %s15
        %p129 = scmp.lt.s32.totalorder %s128, 7
        %s130 = scalar_select %p129, %s128, 7
        %s131 = smul.addr %s130, 3
        %s132 = smul.addr %s131, 8
        %s133 = scalar_lea.vmem %s1, %s132
        %s134 = smul.u32 2, %s15
        %s135 = smul.u32 2, %s15
        %p136 = scmp.lt.s32.totalorder %s135, 7
        %s137 = scalar_select %p136, %s135, 7
        %s138 = smul.addr %s137, 3
        %s139 = smul.addr %s138, 8
        %s140 = scalar_lea.vmem %s1, %s139
        %s141 = smul.u32 2, %s15
        %v142 = vld [vmem:[%s114] sm:$0xff]
        %v143 = vld [vmem:[%s114 + $0x8] sm:$0xff]
        %v144 = vld [vmem:[%s114 + $0x10] sm:$0xff]
        %v145 = vld [vmem:[%s114 + $0x18] sm:$0xff]
        %150 = vrot.lane.b32.xlu0 %v142, 1
        %v151 = vpop.permute.xlu0 %150
        %152 = vrot.lane.b32.xlu0 %v143, 1
        %v153 = vpop.permute.xlu0 %152
        %154 = vrot.lane.b32.xlu0 %v144, 1
        %v155 = vpop.permute.xlu0 %154
        %156 = vrot.lane.b32.xlu0 %v145, 1
        %v157 = vpop.permute.xlu0 %156
        %162 = vrot.lane.b32.xlu0 %v142, 2
        %v163 = vpop.permute.xlu0 %162
        %164 = vrot.lane.b32.xlu0 %v143, 2
        %v165 = vpop.permute.xlu0 %164
        %166 = vrot.lane.b32.xlu0 %v144, 2
        %v167 = vpop.permute.xlu0 %166
        %168 = vrot.lane.b32.xlu0 %v145, 2
        %v169 = vpop.permute.xlu0 %168
        %vm174 = vcmask 7168
        %v175 = vsel %vm174, %v142, %v151
        %v176 = vsel %vm174, %v143, %v153
        %v177 = vsel %vm174, %v144, %v155
        %v178 = vsel %vm174, %v145, %v157
        %vm179 = vcmask 138240
        %v180 = vsel %vm179, %v175, %v163
        %v181 = vsel %vm179, %v176, %v165
        %v182 = vsel %vm179, %v177, %v167
        %v183 = vsel %vm179, %v178, %v169
        %vm184 = vcmask 146432
        %185 = vst.msk [vmem:[%s140 + $0x1] sm:$0xff] %vm184, %v180
        %186 = vst.msk [vmem:[%s140 + $0x9] sm:$0xff] %vm184, %v181
        %187 = vst.msk [vmem:[%s140 + $0x19] sm:$0xff] %vm184, %v182
        %188 = vst.msk [vmem:[%s140 + $0x21] sm:$0xff] %vm184, %v183
        %vm189 = vcmask 139264
        %190 = vst.msk [vmem:[%s140] sm:$0x1] %vm189, %v180
        %191 = vst.msk [vmem:[%s140 + $0x18] sm:$0x1] %vm189, %v182
        %vm192 = vcmask 146439
        %193 = vst.msk [vmem:[%s140 + $0xa] sm:$0x80] %vm192, %v181
        %194 = vst.msk [vmem:[%s140 + $0x22] sm:$0x80] %vm192, %v183
        %s195 = smul.u32 2, %s15
        %p196 = scmp.lt.s32.totalorder %s195, 7
        %s197 = scalar_select %p196, %s195, 7
        %s198 = smul.addr %s197, 3
        %s199 = smul.addr %s198, 8
        %s200 = scalar_lea.vmem %s1, %s199
        // Predicated region
        $region29: #{tpu_custom_call.1} parent=23 // pred_check
          %p201 = pneg %p59
        $region30: #{tpu_custom_call.1} parent=23 // pred_check_branch
          %203 = sbr.rel (%p201) target = $region32
        $region31: #{tpu_custom_call.1} parent=23 // pred_region
          %s204 = smul.u32 2, %s15
        $region32: #{tpu_custom_call.1} parent=23 // pred_fallthru
          _
      $region24: #{tpu_custom_call.1} parent=5 // pred_fallthru
        _
      %p205 = scmp.le.s32.totalorder 2, %s10
      // Predicated region
      $region33: #{tpu_custom_call.1} parent=5 // pred_check
        %p206 = pneg %p205
      $region34: #{tpu_custom_call.1} parent=5 // pred_check_branch
        %208 = sbr.rel (%p206) target = $region36
      $region35: #{tpu_custom_call.1} parent=5 // pred_region
        %s209 = ssub.s32 %s10, 2
        // Predicated region
        $region37: #{tpu_custom_call.1} parent=35 // pred_check
          %p210 = pneg %p65
        $region38: #{tpu_custom_call.1} parent=35 // pred_check_branch
          %212 = sbr.rel (%p210) target = $region40
        $region39: #{tpu_custom_call.1} parent=35 // pred_region
          %s213 = smul.u32 2, %s16
          %p214 = scmp.lt.s32.totalorder %s213, 7
          %s215 = scalar_select %p214, %s213, 7
          %s216 = smul.addr %s215, 3
          %s217 = smul.addr %s216, 8
          %s218 = scalar_lea.vmem %s1, %s217
        $region40: #{tpu_custom_call.1} parent=35 // pred_fallthru
          _
      $region36: #{tpu_custom_call.1} parent=5 // pred_fallthru
        _
    $region6: #{tpu_custom_call.1} parent=1 // loop_footer
      %s14 = sadd.s32 1, %s10
    $region7: #{tpu_custom_call.1} parent=1 // loop_footer_branch
      %9 = sbr.rel target = $region3
    $region8: #{tpu_custom_call.1} parent=1 // loop_exit
      _
    %219 = vsyncpa [#allocation3], 1
    %s220 = scalar_lea.sflag [#allocation3], 1
    %221 = vsyncpa %s220, 1

</llo_original>
